<compile_context>
chip_gen: v6e
topology: v6e:2x2x1
jax: 0.10.0
libtpu: 0.0.40
codegen_flags: <defaults>
</compile_context>

<pallas_src>
import jax
import jax.numpy as jnp
from jax.experimental import pallas as pl
from jax.experimental.pallas import tpu as pltpu


def _round_up(x, m):
    return ((x + m - 1) // m) * m


def _mlp_kernel_T(xT_ref, w1t_ref, b1_ref, w2t_ref, b2_ref, o_ref):
    # xT_ref : (Cin,  TM)    w1t_ref: (Cmid, Cin)   b1_ref: (Cmid, 1)
    # w2t_ref: (Ncls, Cmid)  b2_ref : (Ncls, 1)     o_ref : (Ncls, TM)
    h = jnp.dot(w1t_ref[...], xT_ref[...], preferred_element_type=jnp.float32)
    h = jnp.maximum(h + b1_ref[...], 0.0)          # bias + ReLU in f32
    h = h.astype(w2t_ref.dtype)                    # native-dtype MXU pass in bf16 mode
    y = jnp.dot(w2t_ref[...], h, preferred_element_type=jnp.float32)
    o_ref[...] = (y + b2_ref[...]).astype(o_ref.dtype)


def out_conv_mlp(x, w1, b1, w2, b2, *, tm=None, io_dtype=None, out_dtype=None,
                 transposed_output=False, jax_fallback_below=0):
    """Per-position MLP: x (..., Cin) -> (..., Ncls).

    Weights stored input-major: w1 (Cin, Cmid), w2 (Cmid, Ncls); biases 1-D.
      io_dtype          : optionally narrow x/W1/W2 (e.g. jnp.bfloat16) for the HBM
                          transfer; accumulation stays f32.
      out_dtype         : output dtype (default: x.dtype).
      transposed_output : return channel-major (Ncls, ...) and skip the output
                          transpose (an extra HBM pass) for consumers that accept it.
      jax_fallback_below: if 0 < M < threshold, use a fused plain-JAX path instead of
                          the Pallas kernel (fixed pallas_call cost dominates tiny M).
    """
    orig_shape = x.shape
    out_dtype = x.dtype if out_dtype is None else out_dtype
    cin, cmid = w1.shape
    ncls = w2.shape[1]

    x2 = x.reshape(-1, cin)
    m = x2.shape[0]

    # Tiny-M fallback (opt-in): one fused XLA op beats kernel fixed cost + plumbing.
    if 0 < m < jax_fallback_below:
        y = (jnp.maximum(x2 @ w1 + b1, 0.0) @ w2 + b2).astype(out_dtype)
        if transposed_output:
            return y.T.reshape(ncls, *orig_shape[:-1])
        return y.reshape(*orig_shape[:-1], ncls)

    # ---- Row-tile heuristic -------------------------------------------------
    # TM_MAX=65536 f32: ~6 MiB of double-buffered I/O tiles -> fits v5e (16 MiB
    # default scoped VMEM, raised below), v6e/v7x (32 MiB scoped) with headroom.
    TM_MAX = 65536
    if tm is None:
        if m <= 4096:
            # Single block: fixed per-call overhead dominates anyway.
            tm = _round_up(m, 128)
        else:
            # >= 2 blocks so the "parallel" row axis shards across v7x's two
            # TensorCores; capped so per-step DMA well exceeds the ~0.35 us
            # per-grid-step overhead.
            tm = min(TM_MAX, _round_up(pl.cdiv(m, 2), 128))
    else:
        tm = _round_up(tm, 128)

    m_pad = _round_up(m, tm)
    if m_pad != m:
        x2 = jnp.pad(x2, ((0, m_pad - m), (0, 0)))

    if io_dtype is not None:
        x2 = x2.astype(io_dtype)
        w1 = w1.astype(io_dtype)
        w2 = w2.astype(io_dtype)

    # Wrapper-side layout plumbing: lane-dense operands for the kernel.
    # TODO(synk): if the producer can emit channel-major activations, accept (Cin, M)
    # directly and drop this transpose (a full extra HBM read+write of the input).
    xT = x2.T                                     # (Cin,  Mpad)
    w1t = w1.T                                    # (Cmid, Cin)
    w2t = w2.T                                    # (Ncls, Cmid)
    b1c = b1.astype(jnp.float32).reshape(cmid, 1)
    b2c = b2.astype(jnp.float32).reshape(ncls, 1)

    grid = (m_pad // tm,)

    in_item = x2.dtype.itemsize
    out_item = jnp.dtype(out_dtype).itemsize
    tile_bytes = tm * (cin * in_item + ncls * out_item)
    # Double-buffered tiles + weights, with generous headroom; stays within the
    # scoped-VMEM ceiling on all of v5e / v6e / v7x for the default TM cap.
    vmem_limit = int(min(96 * 1024 * 1024, max(32 * 1024 * 1024, 3 * tile_bytes)))

    cost = pl.CostEstimate(
        flops=2 * m_pad * (cin * cmid + cmid * ncls),
        transcendentals=0,
        bytes_accessed=(xT.size * xT.dtype.itemsize
                        + m_pad * ncls * out_item
                        + w1t.size * w1t.dtype.itemsize
                        + w2t.size * w2t.dtype.itemsize
                        + b1c.size * 4 + b2c.size * 4),
    )

    yT = pl.pallas_call(
        _mlp_kernel_T,
        out_shape=jax.ShapeDtypeStruct((ncls, m_pad), out_dtype),
        grid_spec=pltpu.PrefetchScalarGridSpec(
            num_scalar_prefetch=0,
            grid=grid,
            in_specs=[
                pl.BlockSpec((cin, tm), lambda i: (0, i)),      # X^T tile (lane-dense)
                pl.BlockSpec((cmid, cin), lambda i: (0, 0)),    # W1^T (VMEM-resident)
                pl.BlockSpec((cmid, 1), lambda i: (0, 0)),      # b1   (resident)
                pl.BlockSpec((ncls, cmid), lambda i: (0, 0)),   # W2^T (resident)
                pl.BlockSpec((ncls, 1), lambda i: (0, 0)),      # b2   (resident)
            ],
            out_specs=pl.BlockSpec((ncls, tm), lambda i: (0, i)),   # lane-dense out
        ),
        compiler_params=pltpu.CompilerParams(
            dimension_semantics=("parallel",),    # megacore-shardable on v7x (grid >= 2)
            vmem_limit_bytes=vmem_limit,
        ),
        cost_estimate=cost,
    )(xT, w1t, b1c, w2t, b2c)

    if transposed_output:
        # Channel-major result; avoids a full extra HBM pass for the transpose.
        return yT[:, :m].reshape(ncls, *orig_shape[:-1])

    y = yT.T[:m]                                  # (M, Ncls), drop row padding
    return y.reshape(*orig_shape[:-1], ncls)


def init_params(key, in_channels, mid_channels, n_classes):
    """Deterministic init mimicking nn.Linear's uniform(-1/sqrt(fan_in), 1/sqrt(fan_in))."""
    k1, k2, k3, k4 = jax.random.split(key, 4)
    bound1 = 1.0 / jnp.sqrt(in_channels)
    bound2 = 1.0 / jnp.sqrt(mid_channels)
    # Stored transposed vs. PyTorch (out, in) -> (in, out) so forward is x @ W.
    w1 = jax.random.uniform(k1, (in_channels, mid_channels), jnp.float32, -bound1, bound1)
    b1 = jax.random.uniform(k2, (mid_channels,), jnp.float32, -bound1, bound1)
    w2 = jax.random.uniform(k3, (mid_channels, n_classes), jnp.float32, -bound2, bound2)
    b2 = jax.random.uniform(k4, (n_classes,), jnp.float32, -bound2, bound2)
    return w1, b1, w2, b2


if __name__ == "__main__":
    in_channels, mid_channels, n_classes = 4, 32, 8

    key = jax.random.PRNGKey(0)
    kx, kx2, kp = jax.random.split(key, 3)
    w1, b1, w2, b2 = init_params(kp, in_channels, mid_channels, n_classes)

    # Small case (B=2, 16x16 spatial, channels-last): single-block path, M=512.
    x = jax.random.normal(kx, (2, 16, 16, in_channels), jnp.float32)
    y = out_conv_mlp(x, w1, b1, w2, b2)
    y = jax.block_until_ready(y)
    ref = jnp.maximum(x @ w1 + b1, 0.0) @ w2 + b2
    assert y.shape == (2, 16, 16, n_classes)
    assert jnp.allclose(y, ref, atol=1e-4, rtol=1e-4)

    # Medium case (M=8192): exercises the >=2-block "parallel" grid path.
    x_big = jax.random.normal(kx2, (2, 64, 64, in_channels), jnp.float32)
    y_big = out_conv_mlp(x_big, w1, b1, w2, b2)
    y_big = jax.block_until_ready(y_big)
    ref_big = jnp.maximum(x_big @ w1 + b1, 0.0) @ w2 + b2
    assert y_big.shape == (2, 64, 64, n_classes)
    assert jnp.allclose(y_big, ref_big, atol=1e-4, rtol=1e-4)

    print("KERNEL_OK")
</pallas_src>

<mosaic_0001>
module attributes {stable_mosaic.version = 11 : i64} {
  func.func @_mlp_kernel_T(%arg0: i32, %arg1: memref<4x512xf32, #tpu.memory_space<vmem>>, %arg2: memref<32x4xf32, #tpu.memory_space<vmem>>, %arg3: memref<32x1xf32, #tpu.memory_space<vmem>>, %arg4: memref<8x32xf32, #tpu.memory_space<vmem>>, %arg5: memref<8x1xf32, #tpu.memory_space<vmem>>, %arg6: memref<8x512xf32, #tpu.memory_space<vmem>>) attributes {dimension_semantics = [#tpu.dimension_semantics<parallel>], iteration_bounds = array<i64: 1>, scalar_prefetch = 0 : i64, scratch_operands = 0 : i64, tpu.core_type = #tpu.core_type<tc>, window_params = [{transform_indices = @transform_0, window_bounds = array<i64: 4, 512>}, {pipeline_mode = #tpu.pipeline_mode<synchronous>, transform_indices = @transform_1, window_bounds = array<i64: 32, 4>}, {pipeline_mode = #tpu.pipeline_mode<synchronous>, transform_indices = @transform_2, window_bounds = array<i64: 32, 1>}, {pipeline_mode = #tpu.pipeline_mode<synchronous>, transform_indices = @transform_3, window_bounds = array<i64: 8, 32>}, {pipeline_mode = #tpu.pipeline_mode<synchronous>, transform_indices = @transform_4, window_bounds = array<i64: 8, 1>}, {transform_indices = @transform_5, window_bounds = array<i64: 8, 512>}]} {
    %c0 = arith.constant 0 : index
    %c0_0 = arith.constant 0 : index
    %0 = vector.load %arg2[%c0, %c0_0] : memref<32x4xf32, #tpu.memory_space<vmem>>, vector<32x4xf32>
    %c0_1 = arith.constant 0 : index
    %c0_2 = arith.constant 0 : index
    %1 = vector.load %arg1[%c0_1, %c0_2] : memref<4x512xf32, #tpu.memory_space<vmem>>, vector<4x512xf32>
    %cst = arith.constant dense<0.000000e+00> : vector<32x512xf32>
    %2 = tpu.matmul %0, %1, %cst {dimension_numbers = #tpu.dot_dimension_numbers<[1], [0], [0], [1], [0, 0, 1, 1], [], []>} : vector<32x4xf32>, vector<4x512xf32>, vector<32x512xf32> -> vector<32x512xf32>
    %c0_3 = arith.constant 0 : index
    %c0_4 = arith.constant 0 : index
    %3 = vector.load %arg3[%c0_3, %c0_4] : memref<32x1xf32, #tpu.memory_space<vmem>>, vector<32x1xf32>
    %4 = vector.broadcast %3 : vector<32x1xf32> to vector<32x512xf32>
    %5 = arith.addf %2, %4 : vector<32x512xf32>
    %cst_5 = arith.constant 0.000000e+00 : f32
    %6 = vector.broadcast %cst_5 : f32 to vector<32x512xf32>
    %7 = arith.maximumf %5, %6 : vector<32x512xf32>
    %c0_6 = arith.constant 0 : index
    %c0_7 = arith.constant 0 : index
    %8 = vector.load %arg4[%c0_6, %c0_7] : memref<8x32xf32, #tpu.memory_space<vmem>>, vector<8x32xf32>
    %cst_8 = arith.constant dense<0.000000e+00> : vector<8x512xf32>
    %9 = tpu.matmul %8, %7, %cst_8 {dimension_numbers = #tpu.dot_dimension_numbers<[1], [0], [0], [1], [0, 0, 1, 1], [], []>} : vector<8x32xf32>, vector<32x512xf32>, vector<8x512xf32> -> vector<8x512xf32>
    %c0_9 = arith.constant 0 : index
    %c0_10 = arith.constant 0 : index
    %10 = vector.load %arg5[%c0_9, %c0_10] : memref<8x1xf32, #tpu.memory_space<vmem>>, vector<8x1xf32>
    %11 = vector.broadcast %10 : vector<8x1xf32> to vector<8x512xf32>
    %12 = arith.addf %9, %11 : vector<8x512xf32>
    %c0_11 = arith.constant 0 : index
    %c0_12 = arith.constant 0 : index
    %13 = vector.load %arg6[%c0_11, %c0_12] : memref<8x512xf32, #tpu.memory_space<vmem>>, vector<8x512xf32>
    tpu.vector_store %arg6[%c0_11, %c0_12], %12 {strides = array<i32>} : memref<8x512xf32, #tpu.memory_space<vmem>>, vector<8x512xf32>,
    return
  }
  func.func @transform_0(%arg0: i32) -> (i32, i32) {
    %c0_i32 = arith.constant 0 : i32
    %c0_i32_0 = arith.constant 0 : i32
    return %c0_i32, %arg0 : i32, i32
  }
  func.func @transform_1(%arg0: i32) -> (i32, i32) {
    %c0_i32 = arith.constant 0 : i32
    %c0_i32_0 = arith.constant 0 : i32
    %c0_i32_1 = arith.constant 0 : i32
    return %c0_i32, %c0_i32_0 : i32, i32
  }
  func.func @transform_2(%arg0: i32) -> (i32, i32) {
    %c0_i32 = arith.constant 0 : i32
    %c0_i32_0 = arith.constant 0 : i32
    %c0_i32_1 = arith.constant 0 : i32
    return %c0_i32, %c0_i32_0 : i32, i32
  }
  func.func @transform_3(%arg0: i32) -> (i32, i32) {
    %c0_i32 = arith.constant 0 : i32
    %c0_i32_0 = arith.constant 0 : i32
    %c0_i32_1 = arith.constant 0 : i32
    return %c0_i32, %c0_i32_0 : i32, i32
  }
  func.func @transform_4(%arg0: i32) -> (i32, i32) {
    %c0_i32 = arith.constant 0 : i32
    %c0_i32_0 = arith.constant 0 : i32
    %c0_i32_1 = arith.constant 0 : i32
    return %c0_i32, %c0_i32_0 : i32, i32
  }
  func.func @transform_5(%arg0: i32) -> (i32, i32) {
    %c0_i32 = arith.constant 0 : i32
    %c0_i32_0 = arith.constant 0 : i32
    return %c0_i32, %arg0 : i32, i32
  }
}

</mosaic_0001>

<llo_original>
// kernel: tpu_custom_call.1
$region0: #{tpu_custom_call.1}
  #allocation0 [shape = 'u32[]', space=smem, size = 0x4, offset = 0x4, fixed_abs, tag = 'smem constant byte address 0x4 - core index']
  #allocation1 [shape = 'u32[144,128]{1,0:T(1,128)}', space=vmem, size = 0x12000, scoped, tag = 'internal scratch']
  %s0 = inlined_call_operand.vmem [shape: f32[4,512], index: 0, kind: input, shape index: {}]
  %s1 = inlined_call_operand.vmem [shape: f32[32,4], index: 1, kind: input, shape index: {}]
  %s2 = inlined_call_operand.vmem [shape: f32[32,1], index: 2, kind: input, shape index: {}]
  %s3 = inlined_call_operand.vmem [shape: f32[8,32], index: 3, kind: input, shape index: {}]
  %s4 = inlined_call_operand.vmem [shape: f32[8,1], index: 4, kind: input, shape index: {}]
  %s5 = inlined_call_operand.hbm [shape: f32[8,512], index: 5, kind: output, shape index: {}]
  %s6 = sld [smem:[#allocation0]]
  $region30: #{tpu_custom_call.1} parent=0
    _
  %s8 = ssub.s32 1, %s6
  %s9 = scalar_select 0, %s8, %s6
  $region1: #{tpu_custom_call.1} parent=0
    #allocation2 [shape = 'u8[16384]{0}', space=vmem, size = 0x4000, scoped, tag = 'output window, operand 0, single buffered']
    #allocation3 [shape = 's32[1]{0}', space=sflag, size = 0x4, scoped, tag = 'scoped memory for tpu_custom_call.1']
    %10 = vsyncpa [#allocation3], 0
    // Predicated region
    $region2: #{tpu_custom_call.1} parent=1 // pred_check
      _
    $region3: #{tpu_custom_call.1} parent=1 // pred_check_branch
      %12 = sbr.rel (0) target = $region5
    $region4: #{tpu_custom_call.1} parent=1 // pred_region
      _
    $region5: #{tpu_custom_call.1} parent=1 // pred_fallthru
      _
    // Predicated region
    $region6: #{tpu_custom_call.1} parent=1 // pred_check
      _
    $region7: #{tpu_custom_call.1} parent=1 // pred_check_branch
      %14 = sbr.rel (0) target = $region9
    $region8: #{tpu_custom_call.1} parent=1 // pred_region
      _
    $region9: #{tpu_custom_call.1} parent=1 // pred_fallthru
      _
    // Predicated region
    $region10: #{tpu_custom_call.1} parent=1 // pred_check
      _
    $region11: #{tpu_custom_call.1} parent=1 // pred_check_branch
      %16 = sbr.rel (0) target = $region13
    $region12: #{tpu_custom_call.1} parent=1 // pred_region
      _
    $region13: #{tpu_custom_call.1} parent=1 // pred_fallthru
      _
    // Predicated region
    $region14: #{tpu_custom_call.1} parent=1 // pred_check
      _
    $region15: #{tpu_custom_call.1} parent=1 // pred_check_branch
      %18 = sbr.rel (0) target = $region17
    $region16: #{tpu_custom_call.1} parent=1 // pred_region
      _
    $region17: #{tpu_custom_call.1} parent=1 // pred_fallthru
      _
    // Predicated region
    $region18: #{tpu_custom_call.1} parent=1 // pred_check
      _
    $region19: #{tpu_custom_call.1} parent=1 // pred_check_branch
      %20 = sbr.rel (0) target = $region21
    $region20: #{tpu_custom_call.1} parent=1 // pred_region
      _
    $region21: #{tpu_custom_call.1} parent=1 // pred_fallthru
      _
    %v21 = vld [vmem:[%s1] sm:$0xff]
    %v22 = vld [vmem:[%s1 + $0x8] sm:$0xff]
    %v23 = vld [vmem:[%s1 + $0x10] sm:$0xff]
    %v24 = vld [vmem:[%s1 + $0x18] sm:$0xff]
    %v25 = vld [vmem:[%s0] sm:$0xff]
    %v26 = vld [vmem:[%s0 + $0x8] sm:$0xff]
    %v27 = vld [vmem:[%s2] sm:$0xff]
    %v28 = vld [vmem:[%s2 + $0x8] sm:$0xff]
    %v29 = vld [vmem:[%s2 + $0x10] sm:$0xff]
    %v30 = vld [vmem:[%s2 + $0x18] sm:$0xff]
    %32 = vset.pattern.permute.xlu0 0
    %33 = vperm.xlu0 %32, %v27
    %v34 = vpop.permute.xlu0 %33
    %37 = vset.pattern.permute.xlu0 0
    %38 = vperm.xlu0 %37, %v28
    %v39 = vpop.permute.xlu0 %38
    %42 = vset.pattern.permute.xlu0 0
    %43 = vperm.xlu0 %42, %v29
    %v44 = vpop.permute.xlu0 %43
    %47 = vset.pattern.permute.xlu0 0
    %48 = vperm.xlu0 %47, %v30
    %v49 = vpop.permute.xlu0 %48
    %v53 = vcombine.high %v25, %v25
    %v54 = vcombine.high %v26, %v26
    %vm55 = vcmask 31744
    %v57 = vsel %vm55, %v21, 0
    %v60 = vsel %vm55, %v22, 0
    %v63 = vsel %vm55, %v23, 0
    %v66 = vsel %vm55, %v24, 0
    %vm68 = vcmask 1043456
    %v69 = vsel %vm68, %v25, 0
    %v71 = vsel %vm68, %v53, 0
    %v73 = vsel %vm68, %v26, 0
    %v75 = vsel %vm68, %v54, 0
    %77 = vmatprep.subr.mxu0 0.0
    %78 = vmatpush1.msra.mxu0 0.0
    %79 = vmatprep.subr.mxu0 0.0
    %80 = vmatpush1.msra.mxu0 0.0
    %81 = vmatprep.subr.mxu0 0.0
    %82 = vmatpush1.msra.mxu0 0.0
    %83 = vmatprep.subr.mxu0 0.0
    %84 = vmatpush1.msra.mxu0 0.0
    %85 = vmatprep.subr.mxu0 0.0
    %86 = vmatpush1.msra.mxu0 0.0
    %87 = vmatprep.subr.mxu0 0.0
    %88 = vmatpush1.msra.mxu0 0.0
    %89 = vmatprep.subr.mxu0 0.0
    %90 = vmatpush1.msra.mxu0 0.0
    %91 = vmatprep.subr.mxu0 0.0
    %92 = vmatpush1.msra.mxu0 0.0
    %93 = vmatprep.subr.mxu0 0.0
    %94 = vmatpush1.msra.mxu0 0.0
    %95 = vmatprep.subr.mxu0 0.0
    %96 = vmatpush1.msra.mxu0 0.0
    %97 = vmatprep.subr.mxu0 0.0
    %98 = vmatpush1.msra.mxu0 0.0
    %99 = vmatprep.subr.mxu0 0.0
    %100 = vmatpush1.msra.mxu0 0.0
    %101 = vmatprep.subr.mxu0 0.0
    %102 = vmatpush1.msra.mxu0 0.0
    %103 = vmatprep.subr.mxu0 0.0
    %104 = vmatpush1.msra.mxu0 0.0
    %105 = vmatprep.subr.mxu0 0.0
    %106 = vmatpush1.msra.mxu0 0.0
    %107 = vmatprep.subr.mxu0 %v71
    %108 = vmatpush1.msra.mxu0 %v69
    %109 = vmatprep.subr.mxu0 0.0
    %110 = vmatpush2.msra.mxu0 0.0
    %111 = vmatprep.subr.mxu0 0.0
    %112 = vmatpush2.msra.mxu0 0.0
    %113 = vmatprep.subr.mxu0 0.0
    %114 = vmatpush2.msra.mxu0 0.0
    %115 = vmatprep.subr.mxu0 0.0
    %116 = vmatpush2.msra.mxu0 0.0
    %117 = vmatprep.subr.mxu0 0.0
    %118 = vmatpush2.msra.mxu0 0.0
    %119 = vmatprep.subr.mxu0 0.0
    %120 = vmatpush2.msra.mxu0 0.0
    %121 = vmatprep.subr.mxu0 0.0
    %122 = vmatpush2.msra.mxu0 0.0
    %123 = vmatprep.subr.mxu0 0.0
    %124 = vmatpush2.msra.mxu0 0.0
    %125 = vmatprep.subr.mxu0 0.0
    %126 = vmatpush2.msra.mxu0 0.0
    %127 = vmatprep.subr.mxu0 0.0
    %128 = vmatpush2.msra.mxu0 0.0
    %129 = vmatprep.subr.mxu0 0.0
    %130 = vmatpush2.msra.mxu0 0.0
    %131 = vmatprep.subr.mxu0 0.0
    %132 = vmatpush2.msra.mxu0 0.0
    %133 = vmatprep.subr.mxu0 0.0
    %134 = vmatpush2.msra.mxu0 0.0
    %135 = vmatprep.subr.mxu0 0.0
    %136 = vmatpush2.msra.mxu0 0.0
    %137 = vmatprep.subr.mxu0 0.0
    %138 = vmatpush2.msra.mxu0 0.0
    %139 = vmatprep.subr.mxu0 0.0
    %140 = vmatpush2.msra.mxu0 0.0
    %141 = vmatprep.mubr.f32.mxu0 0.0
    %142 = vmatmul.mubr.f32.gmra.mxu0 %v57
    %v143 = vpop.f32.mrf.mxu0
    %v144 = vadd.f32 %v34, %v143
    %v145 = vpop.f32.mrf.mxu0
    %v146 = vadd.f32 %v34, %v145
    %147 = vmatprep.mubr.f32.mxu0 0.0
    %148 = vmatmul.mubr.f32.gmra.mxu0 %v60
    %v149 = vpop.f32.mrf.mxu0
    %v150 = vadd.f32 %v39, %v149
    %v151 = vpop.f32.mrf.mxu0
    %v152 = vadd.f32 %v39, %v151
    %153 = vmatprep.mubr.f32.mxu0 0.0
    %154 = vmatmul.mubr.f32.gmra.mxu0 %v63
    %v155 = vpop.f32.mrf.mxu0
    %v156 = vadd.f32 %v44, %v155
    %v157 = vpop.f32.mrf.mxu0
    %v158 = vadd.f32 %v44, %v157
    %159 = vmatprep.mubr.f32.mxu0 0.0
    %160 = vmatmul.mubr.f32.gmra.mxu0 %v66
    %v161 = vpop.f32.mrf.mxu0
    %v162 = vadd.f32 %v49, %v161
    %v163 = vpop.f32.mrf.mxu0
    %v164 = vadd.f32 %v49, %v163
    %165 = vdwg.mxu0
    %166 = vmatprep.subr.mxu0 0.0
    %167 = vmatpush1.msra.mxu0 0.0
    %168 = vmatprep.subr.mxu0 0.0
    %169 = vmatpush1.msra.mxu0 0.0
    %170 = vmatprep.subr.mxu0 0.0
    %171 = vmatpush1.msra.mxu0 0.0
    %172 = vmatprep.subr.mxu0 0.0
    %173 = vmatpush1.msra.mxu0 0.0
    %174 = vmatprep.subr.mxu0 0.0
    %175 = vmatpush1.msra.mxu0 0.0
    %176 = vmatprep.subr.mxu0 0.0
    %177 = vmatpush1.msra.mxu0 0.0
    %178 = vmatprep.subr.mxu0 0.0
    %179 = vmatpush1.msra.mxu0 0.0
    %180 = vmatprep.subr.mxu0 0.0
    %181 = vmatpush1.msra.mxu0 0.0
    %182 = vmatprep.subr.mxu0 0.0
    %183 = vmatpush1.msra.mxu0 0.0
    %184 = vmatprep.subr.mxu0 0.0
    %185 = vmatpush1.msra.mxu0 0.0
    %186 = vmatprep.subr.mxu0 0.0
    %187 = vmatpush1.msra.mxu0 0.0
    %188 = vmatprep.subr.mxu0 0.0
    %189 = vmatpush1.msra.mxu0 0.0
    %190 = vmatprep.subr.mxu0 0.0
    %191 = vmatpush1.msra.mxu0 0.0
    %192 = vmatprep.subr.mxu0 0.0
    %193 = vmatpush1.msra.mxu0 0.0
    %194 = vmatprep.subr.mxu0 0.0
    %195 = vmatpush1.msra.mxu0 0.0
    %196 = vmatprep.subr.mxu0 %v75
    %197 = vmatpush1.msra.mxu0 %v73
    %198 = vmatprep.subr.mxu0 0.0
    %199 = vmatpush2.msra.mxu0 0.0
    %200 = vmatprep.subr.mxu0 0.0
    %201 = vmatpush2.msra.mxu0 0.0
    %202 = vmatprep.subr.mxu0 0.0
    %203 = vmatpush2.msra.mxu0 0.0
    %204 = vmatprep.subr.mxu0 0.0
    %205 = vmatpush2.msra.mxu0 0.0
    %206 = vmatprep.subr.mxu0 0.0
    %207 = vmatpush2.msra.mxu0 0.0
    %208 = vmatprep.subr.mxu0 0.0
    %209 = vmatpush2.msra.mxu0 0.0
    %210 = vmatprep.subr.mxu0 0.0
    %211 = vmatpush2.msra.mxu0 0.0
    %212 = vmatprep.subr.mxu0 0.0
    %213 = vmatpush2.msra.mxu0 0.0
    %214 = vmatprep.subr.mxu0 0.0
    %215 = vmatpush2.msra.mxu0 0.0
    %216 = vmatprep.subr.mxu0 0.0
    %217 = vmatpush2.msra.mxu0 0.0
    %218 = vmatprep.subr.mxu0 0.0
    %219 = vmatpush2.msra.mxu0 0.0
    %220 = vmatprep.subr.mxu0 0.0
    %221 = vmatpush2.msra.mxu0 0.0
    %222 = vmatprep.subr.mxu0 0.0
    %223 = vmatpush2.msra.mxu0 0.0
    %224 = vmatprep.subr.mxu0 0.0
    %225 = vmatpush2.msra.mxu0 0.0
    %226 = vmatprep.subr.mxu0 0.0
    %227 = vmatpush2.msra.mxu0 0.0
    %228 = vmatprep.subr.mxu0 0.0
    %229 = vmatpush2.msra.mxu0 0.0
    %230 = vmatprep.mubr.f32.mxu0 0.0
    %231 = vmatmul.mubr.f32.gmra.mxu0 %v57
    %v232 = vpop.f32.mrf.mxu0
    %v233 = vadd.f32 %v34, %v232
    %v234 = vpop.f32.mrf.mxu0
    %v235 = vadd.f32 %v34, %v234
    %236 = vmatprep.mubr.f32.mxu0 0.0
    %237 = vmatmul.mubr.f32.gmra.mxu0 %v60
    %v238 = vpop.f32.mrf.mxu0
    %v239 = vadd.f32 %v39, %v238
    %v240 = vpop.f32.mrf.mxu0
    %v241 = vadd.f32 %v39, %v240
    %242 = vmatprep.mubr.f32.mxu0 0.0
    %243 = vmatmul.mubr.f32.gmra.mxu0 %v63
    %v244 = vpop.f32.mrf.mxu0
    %v245 = vadd.f32 %v44, %v244
    %v246 = vpop.f32.mrf.mxu0
    %v247 = vadd.f32 %v44, %v246
    %248 = vmatprep.mubr.f32.mxu0 0.0
    %249 = vmatmul.mubr.f32.gmra.mxu0 %v66
    %v250 = vpop.f32.mrf.mxu0
    %v251 = vadd.f32 %v49, %v250
    %v252 = vpop.f32.mrf.mxu0
    %v253 = vadd.f32 %v49, %v252
    %254 = vdwg.mxu0
    %v255 = vmax.f32 %v144, 0.0
    %v256 = vmax.f32 %v146, 0.0
    %v257 = vmax.f32 %v233, 0.0
    %v258 = vmax.f32 %v235, 0.0
    %v259 = vmax.f32 %v150, 0.0
    %v260 = vmax.f32 %v152, 0.0
    %v261 = vmax.f32 %v239, 0.0
    %v262 = vmax.f32 %v241, 0.0
    %v263 = vmax.f32 %v156, 0.0
    %v264 = vmax.f32 %v158, 0.0
    %v265 = vmax.f32 %v245, 0.0
    %v266 = vmax.f32 %v247, 0.0
    %v267 = vmax.f32 %v162, 0.0
    %v268 = vmax.f32 %v164, 0.0
    %v269 = vmax.f32 %v251, 0.0
    %v270 = vmax.f32 %v253, 0.0
    %v271 = vld [vmem:[%s3] sm:$0xff]
    %v272 = vld [vmem:[%s4] sm:$0xff]
    %274 = vset.pattern.permute.xlu0 0
    %275 = vperm.xlu0 %274, %v272
    %v276 = vpop.permute.xlu0 %275
    %vm278 = vcmask 261120
    %v280 = vsel %vm278, %v271, 0
    %282 = vmatprep.subr.mxu0 0.0
    %283 = vmatpush1.msra.mxu0 0.0
    %284 = vmatprep.subr.mxu0 0.0
    %285 = vmatpush1.msra.mxu0 0.0
    %286 = vmatprep.subr.mxu0 0.0
    %287 = vmatpush1.msra.mxu0 0.0
    %288 = vmatprep.subr.mxu0 0.0
    %289 = vmatpush1.msra.mxu0 0.0
    %290 = vmatprep.subr.mxu0 0.0
    %291 = vmatpush1.msra.mxu0 0.0
    %292 = vmatprep.subr.mxu0 0.0
    %293 = vmatpush1.msra.mxu0 0.0
    %294 = vmatprep.subr.mxu0 0.0
    %295 = vmatpush1.msra.mxu0 0.0
    %296 = vmatprep.subr.mxu0 0.0
    %297 = vmatpush1.msra.mxu0 0.0
    %298 = vmatprep.subr.mxu0 0.0
    %299 = vmatpush1.msra.mxu0 0.0
    %300 = vmatprep.subr.mxu0 0.0
    %301 = vmatpush1.msra.mxu0 0.0
    %302 = vmatprep.subr.mxu0 0.0
    %303 = vmatpush1.msra.mxu0 0.0
    %304 = vmatprep.subr.mxu0 0.0
    %305 = vmatpush1.msra.mxu0 0.0
    %306 = vmatprep.subr.mxu0 %v268
    %307 = vmatpush1.msra.mxu0 %v267
    %308 = vmatprep.subr.mxu0 %v264
    %309 = vmatpush1.msra.mxu0 %v263
    %310 = vmatprep.subr.mxu0 %v260
    %311 = vmatpush1.msra.mxu0 %v259
    %312 = vmatprep.subr.mxu0 %v256
    %313 = vmatpush1.msra.mxu0 %v255
    %314 = vmatprep.subr.mxu0 0.0
    %315 = vmatpush2.msra.mxu0 0.0
    %316 = vmatprep.subr.mxu0 0.0
    %317 = vmatpush2.msra.mxu0 0.0
    %318 = vmatprep.subr.mxu0 0.0
    %319 = vmatpush2.msra.mxu0 0.0
    %320 = vmatprep.subr.mxu0 0.0
    %321 = vmatpush2.msra.mxu0 0.0
    %322 = vmatprep.subr.mxu0 0.0
    %323 = vmatpush2.msra.mxu0 0.0
    %324 = vmatprep.subr.mxu0 0.0
    %325 = vmatpush2.msra.mxu0 0.0
    %326 = vmatprep.subr.mxu0 0.0
    %327 = vmatpush2.msra.mxu0 0.0
    %328 = vmatprep.subr.mxu0 0.0
    %329 = vmatpush2.msra.mxu0 0.0
    %330 = vmatprep.subr.mxu0 0.0
    %331 = vmatpush2.msra.mxu0 0.0
    %332 = vmatprep.subr.mxu0 0.0
    %333 = vmatpush2.msra.mxu0 0.0
    %334 = vmatprep.subr.mxu0 0.0
    %335 = vmatpush2.msra.mxu0 0.0
    %336 = vmatprep.subr.mxu0 0.0
    %337 = vmatpush2.msra.mxu0 0.0
    %338 = vmatprep.subr.mxu0 0.0
    %339 = vmatpush2.msra.mxu0 0.0
    %340 = vmatprep.subr.mxu0 0.0
    %341 = vmatpush2.msra.mxu0 0.0
    %342 = vmatprep.subr.mxu0 0.0
    %343 = vmatpush2.msra.mxu0 0.0
    %344 = vmatprep.subr.mxu0 0.0
    %345 = vmatpush2.msra.mxu0 0.0
    %346 = vmatprep.mubr.f32.mxu0 0.0
    %347 = vmatmul.mubr.f32.gmra.mxu0 %v280
    %v348 = vpop.f32.mrf.mxu0
    %v349 = vadd.f32 %v276, %v348
    %v350 = vpop.f32.mrf.mxu0
    %v351 = vadd.f32 %v276, %v350
    %352 = vdwg.mxu0
    %353 = vmatprep.subr.mxu0 0.0
    %354 = vmatpush1.msra.mxu0 0.0
    %355 = vmatprep.subr.mxu0 0.0
    %356 = vmatpush1.msra.mxu0 0.0
    %357 = vmatprep.subr.mxu0 0.0
    %358 = vmatpush1.msra.mxu0 0.0
    %359 = vmatprep.subr.mxu0 0.0
    %360 = vmatpush1.msra.mxu0 0.0
    %361 = vmatprep.subr.mxu0 0.0
    %362 = vmatpush1.msra.mxu0 0.0
    %363 = vmatprep.subr.mxu0 0.0
    %364 = vmatpush1.msra.mxu0 0.0
    %365 = vmatprep.subr.mxu0 0.0
    %366 = vmatpush1.msra.mxu0 0.0
    %367 = vmatprep.subr.mxu0 0.0
    %368 = vmatpush1.msra.mxu0 0.0
    %369 = vmatprep.subr.mxu0 0.0
    %370 = vmatpush1.msra.mxu0 0.0
    %371 = vmatprep.subr.mxu0 0.0
    %372 = vmatpush1.msra.mxu0 0.0
    %373 = vmatprep.subr.mxu0 0.0
    %374 = vmatpush1.msra.mxu0 0.0
    %375 = vmatprep.subr.mxu0 0.0
    %376 = vmatpush1.msra.mxu0 0.0
    %377 = vmatprep.subr.mxu0 %v270
    %378 = vmatpush1.msra.mxu0 %v269
    %379 = vmatprep.subr.mxu0 %v266
    %380 = vmatpush1.msra.mxu0 %v265
    %381 = vmatprep.subr.mxu0 %v262
    %382 = vmatpush1.msra.mxu0 %v261
    %383 = vmatprep.subr.mxu0 %v258
    %384 = vmatpush1.msra.mxu0 %v257
    %385 = vmatprep.subr.mxu0 0.0
    %386 = vmatpush2.msra.mxu0 0.0
    %387 = vmatprep.subr.mxu0 0.0
    %388 = vmatpush2.msra.mxu0 0.0
    %389 = vmatprep.subr.mxu0 0.0
    %390 = vmatpush2.msra.mxu0 0.0
    %391 = vmatprep.subr.mxu0 0.0
    %392 = vmatpush2.msra.mxu0 0.0
    %393 = vmatprep.subr.mxu0 0.0
    %394 = vmatpush2.msra.mxu0 0.0
    %395 = vmatprep.subr.mxu0 0.0
    %396 = vmatpush2.msra.mxu0 0.0
    %397 = vmatprep.subr.mxu0 0.0
    %398 = vmatpush2.msra.mxu0 0.0
    %399 = vmatprep.subr.mxu0 0.0
    %400 = vmatpush2.msra.mxu0 0.0
    %401 = vmatprep.subr.mxu0 0.0
    %402 = vmatpush2.msra.mxu0 0.0
    %403 = vmatprep.subr.mxu0 0.0
    %404 = vmatpush2.msra.mxu0 0.0
    %405 = vmatprep.subr.mxu0 0.0
    %406 = vmatpush2.msra.mxu0 0.0
    %407 = vmatprep.subr.mxu0 0.0
    %408 = vmatpush2.msra.mxu0 0.0
    %409 = vmatprep.subr.mxu0 0.0
    %410 = vmatpush2.msra.mxu0 0.0
    %411 = vmatprep.subr.mxu0 0.0
    %412 = vmatpush2.msra.mxu0 0.0
    %413 = vmatprep.subr.mxu0 0.0
    %414 = vmatpush2.msra.mxu0 0.0
    %415 = vmatprep.subr.mxu0 0.0
    %416 = vmatpush2.msra.mxu0 0.0
    %417 = vmatprep.mubr.f32.mxu0 0.0
    %418 = vmatmul.mubr.f32.gmra.mxu0 %v280
    %v419 = vpop.f32.mrf.mxu0
    %v420 = vadd.f32 %v276, %v419
    %v421 = vpop.f32.mrf.mxu0
    %v422 = vadd.f32 %v276, %v421
    %423 = vdwg.mxu0
    %424 = vst [vmem:[#allocation2] sm:$0xff] %v349
    %425 = vst [vmem:[#allocation2 + $0x8] sm:$0xff] %v351
    %426 = vst [vmem:[#allocation2 + $0x10] sm:$0xff] %v420
    %427 = vst [vmem:[#allocation2 + $0x18] sm:$0xff] %v422
    // Predicated region
    $region22: #{tpu_custom_call.1} parent=1 // pred_check
      _
    $region23: #{tpu_custom_call.1} parent=1 // pred_check_branch
      %429 = sbr.rel (0) target = $region25
    $region24: #{tpu_custom_call.1} parent=1 // pred_region
      %s431 = ssub.s32 512, 512
      %432 = vsyncadd [#allocation3], %s431
      %s434 = sshll.u32 [#allocation2], 4
      %s435 = int_to_ptr.vmem [resolvable:$true] %s434
      %437 = dma.vmem_to_hbm [thread:$0]  %s435, 512, %s5, [#allocation3]
    $region25: #{tpu_custom_call.1} parent=1 // pred_fallthru
      _
    // Predicated region
    $region26: #{tpu_custom_call.1} parent=1 // pred_check
      _
    $region27: #{tpu_custom_call.1} parent=1 // pred_check_branch
      %439 = sbr.rel (0) target = $region29
    $region28: #{tpu_custom_call.1} parent=1 // pred_region
      %440 = dma.done [#allocation3], 512
    $region29: #{tpu_custom_call.1} parent=1 // pred_fallthru
      _
    %441 = vsyncpa [#allocation3], 1

</llo_original>
